<compile_context>
chip_gen: v7x
topology: tpu7x:2x2x1
jax: 0.10.0
libtpu: 0.0.40
codegen_flags: <defaults>
</compile_context>

<pallas_src>
import math
import functools
from typing import NamedTuple

import jax
import jax.numpy as jnp
from jax import lax
from jax.experimental import pallas as pl
from jax.experimental.pallas import tpu as pltpu

S_DEFAULT = 30.0
M_DEFAULT = 3            # mlambda[3](x) = 4x^3 - 3x
EPS = 1e-8
PI_CONST = 3.14159265    # exact constant used by the PyTorch code (NOT math.pi)

# k = floor(m * acos(c) / PI_CONST).  acos is monotone decreasing on [-1, 1], so
#   floor(m*acos(c)/PI_CONST) >= j  <=>  c <= cos(j * PI_CONST / m)
# -> k is a sum of three threshold compares (no acos needed in the kernel).
_T1 = math.cos(1.0 * PI_CONST / M_DEFAULT)
_T2 = math.cos(2.0 * PI_CONST / M_DEFAULT)
_T3 = math.cos(3.0 * PI_CONST / M_DEFAULT)


def _round_up(n, g):
    return ((n + g - 1) // g) * g


class PreparedWeight(NamedTuple):
    """One-time-per-weight prep: lane-major (D, Cp) weight + s-scaled inverse norms."""
    wt: jax.Array        # (D, Cp) compute dtype, classes on lanes, zero-padded
    invwn_s: jax.Array   # (1, Cp) f32, s / max(||w_j||, eps), zero in padding
    n_classes: int       # original C
    tc: int              # class tile size used for padding
    s: float


def prepare_weight(weight, *, s=S_DEFAULT, block_c=1024,
                   compute_dtype=jnp.bfloat16):
    """Transpose/pad/cast the (C, D) weight once; cache the result across calls."""
    C, _ = weight.shape
    tc = _round_up(min(block_c, _round_up(C, 128)), 128)
    Cp = _round_up(C, tc)
    w32 = weight.astype(jnp.float32)
    invwn_s = (s / jnp.maximum(jnp.sqrt(jnp.sum(w32 * w32, axis=1)), EPS)
               ).reshape(1, C)
    wt_p = jnp.pad(weight.T, ((0, 0), (0, Cp - C))).astype(compute_dtype)
    invwns_p = jnp.pad(invwn_s, ((0, 0), (0, Cp - C)))     # zero pad -> cosine 0
    return PreparedWeight(wt=wt_p, invwn_s=invwns_p, n_classes=C, tc=tc, s=float(s))


def _mcp_kernel(has_ref, label_ref, x_ref, invxn_ref, wt_ref, invwns_ref, out_ref,
                *, s, block_c, nb):
    # has_ref:    (nc*nb,) int32 SMEM (scalar prefetch): does tile contain a label?
    # label_ref:  (TB, 1)  int32
    # x_ref:      (TB, D)  compute dtype
    # invxn_ref:  (TB, 1)  f32, 1/max(||x_i||, eps) precomputed in f32
    # wt_ref:     (D, TC)  compute dtype, pre-transposed weight slab
    # invwns_ref: (1, TC)  f32, s/max(||w_j||, eps)
    # out_ref:    (TB, TC) out dtype
    j = pl.program_id(0)   # class tile (outer, core-parallel)
    i = pl.program_id(1)   # batch tile (inner; W block index invariant here)

    # MXU: (TB, D) @ (D, TC), f32 accumulation; epilogue = two broadcast multiplies.
    ip = jnp.dot(x_ref[...], wt_ref[...], preferred_element_type=jnp.float32)
    cosine_s = ip * invxn_ref[...] * invwns_ref[...]        # == s * cosine

    has_label = has_ref[j * nb + i]

    @pl.when(has_label == 0)
    def _():   # for large C, >90% of tiles: no margin work at all.
        out_ref[...] = cosine_s.astype(out_ref.dtype)

    @pl.when(has_label != 0)
    def _():
        col0 = j * block_c
        cls_ids = lax.broadcasted_iota(jnp.int32, (1, block_c), 1) + col0
        mask = cls_ids == label_ref[...]                     # (TB, TC) bool
        # Margin transform only on the label column ((TB, 1) work).
        cos_l = (jnp.sum(jnp.where(mask, cosine_s, 0.0), axis=1, keepdims=True)
                 * (1.0 / s))                                # descale the folded s
        cos_m_theta = (4.0 * cos_l * cos_l - 3.0) * cos_l    # cos(3*theta)
        a = cos_l <= _T1
        b = cos_l <= _T2
        c = cos_l <= _T3
        k = a.astype(jnp.float32) + b.astype(jnp.float32) + c.astype(jnp.float32)
        sign = jnp.where(jnp.logical_xor(jnp.logical_xor(a, b), c), -1.0, 1.0)
        phi_l_s = s * (sign * cos_m_theta - 2.0 * k)         # (TB, 1) = s*phi(theta)
        out_ref[...] = jnp.where(mask, phi_l_s, cosine_s).astype(out_ref.dtype)


def margin_cosine_product(x, label, prepared: PreparedWeight, *, m=M_DEFAULT,
                          block_b=256, out_dtype=jnp.float32):
    """Forward pass. `prepared` comes from prepare_weight(weight) (compute it once)."""
    assert m == M_DEFAULT, "kernel is specialized to the default margin m=3"
    B, D = x.shape
    D2, Cp = prepared.wt.shape
    assert D == D2
    C = prepared.n_classes
    tc = prepared.tc
    s = prepared.s
    compute_dtype = prepared.wt.dtype

    # Batch tile: sublane granularity 16 (bf16 packing; also a multiple of the f32 8).
    tb = _round_up(min(block_b, _round_up(B, 16)), 16)
    Bp = _round_up(B, tb)
    nb = Bp // tb
    nc = Cp // tc

    # Per-row inverse norm in f32 (hoisted: computed once, not once per class tile).
    x32 = x.astype(jnp.float32)
    inv_xn = lax.rsqrt(jnp.maximum(jnp.sum(x32 * x32, axis=1, keepdims=True),
                                   EPS * EPS))
    x_p = jnp.pad(x, ((0, Bp - B), (0, 0))).astype(compute_dtype)
    invxn_p = jnp.pad(inv_xn, ((0, Bp - B), (0, 0)))
    # Pad labels with -1 so padded rows never match any class column.
    label_p = jnp.pad(label.reshape(B, 1).astype(jnp.int32), ((0, Bp - B), (0, 0)),
                      constant_values=-1)

    # Tiny SMEM table: (class tile, batch tile) -> tile contains some row's label.
    bt = jnp.arange(B, dtype=jnp.int32) // tb
    ct = label.astype(jnp.int32) // tc
    has_flat = jnp.zeros((nc * nb,), jnp.int32).at[ct * nb + bt].set(1)

    grid = (nc, nb)    # class tiles outer (core-parallel), batch tiles inner
    kernel = functools.partial(_mcp_kernel, s=s, block_c=tc, nb=nb)

    cost = pl.CostEstimate(
        flops=2 * Bp * Cp * D,
        transcendentals=0,
        bytes_accessed=(prepared.wt.size * prepared.wt.dtype.itemsize     # W once
                        + nc * x_p.size * x_p.dtype.itemsize              # x per C-tile
                        + Bp * Cp * jnp.dtype(out_dtype).itemsize))       # output

    # TODO(synk): generation-specific tile sweep — v5e/v6e (128 MiB VMEM) can go to
    # block_b=512 / block_c=2048 (raise vmem_limit_bytes); v7x (64 MiB physical,
    # 32 MiB scoped default) should stay around block_b=256 / block_c=1024.
    out = pl.pallas_call(
        kernel,
        out_shape=jax.ShapeDtypeStruct((Bp, Cp), out_dtype),
        grid_spec=pltpu.PrefetchScalarGridSpec(
            num_scalar_prefetch=1,
            grid=grid,
            in_specs=[
                pl.BlockSpec((tb, 1), lambda j, i, hl: (i, 0)),   # label
                pl.BlockSpec((tb, D), lambda j, i, hl: (i, 0)),   # x
                pl.BlockSpec((tb, 1), lambda j, i, hl: (i, 0)),   # 1/||x||
                pl.BlockSpec((D, tc), lambda j, i, hl: (0, j)),   # W slab (inner-inv.)
                pl.BlockSpec((1, tc), lambda j, i, hl: (0, j)),   # s/||w||
            ],
            out_specs=pl.BlockSpec((tb, tc), lambda j, i, hl: (i, j)),
        ),
        compiler_params=pltpu.CompilerParams(
            dimension_semantics=("parallel", "arbitrary")),
        cost_estimate=cost,
    )(has_flat, label_p, x_p, invxn_p, prepared.wt, prepared.invwn_s)

    return out[:B, :C]


def margin_cosine_product_from_weight(x, weight, label, *, s=S_DEFAULT, m=M_DEFAULT,
                                      block_b=256, block_c=1024,
                                      compute_dtype=jnp.bfloat16,
                                      out_dtype=jnp.float32):
    """Convenience wrapper: prep + kernel.  For repeated calls, cache prepare_weight."""
    prepared = prepare_weight(weight, s=s, block_c=block_c,
                              compute_dtype=compute_dtype)
    return margin_cosine_product(x, label, prepared, m=m, block_b=block_b,
                                 out_dtype=out_dtype)


def _reference(x, weight, label, *, s=S_DEFAULT, m=M_DEFAULT):
    """Pure-JAX reference mirroring the PyTorch forward exactly."""
    ip = x @ weight.T
    w1 = jnp.linalg.norm(x, axis=1)
    w2 = jnp.linalg.norm(weight, axis=1)
    cosine = ip / jnp.clip(jnp.outer(w1, w2), EPS, None)
    one_hot = jax.nn.one_hot(label, weight.shape[0], dtype=cosine.dtype)
    cos_m_theta = 4.0 * cosine ** 3 - 3.0 * cosine
    theta = jnp.arccos(jnp.clip(cosine, -1.0, 1.0))
    k = jnp.floor(m * theta / PI_CONST)
    phi_theta = (-1.0) ** k * cos_m_theta - 2.0 * k
    return s * (one_hot * phi_theta + (1.0 - one_hot) * cosine)


if __name__ == "__main__":
    batch = 32
    in_features = 64
    out_features = 256

    key = jax.random.PRNGKey(0)
    kx, kw, kl, kl2 = jax.random.split(key, 4)

    x = jax.random.normal(kx, (batch, in_features), dtype=jnp.float32)
    # Deterministic xavier_uniform_ init for weight (out_features, in_features)
    bound = math.sqrt(6.0 / (in_features + out_features))
    weight = jax.random.uniform(kw, (out_features, in_features), dtype=jnp.float32,
                                minval=-bound, maxval=bound)
    # Labels restricted to the first class tile (tc=128) so the second class tile
    # exercises the gated "no margin work" fast path.
    label = jax.random.randint(kl, (batch,), 0, 128, dtype=jnp.int32)

    # bf16 compute path; weight prepared once and reused (persistent (D, C) bf16 copy).
    prepared = prepare_weight(weight, block_c=128, compute_dtype=jnp.bfloat16)
    out = margin_cosine_product(x, label, prepared, block_b=16)
    out = jax.block_until_ready(out)
    ref = _reference(x, weight, label)
    assert out.shape == (batch, out_features)
    assert jnp.allclose(out, ref, rtol=2e-2, atol=1e-1), (
        f"bf16 path max abs diff = {jnp.max(jnp.abs(out - ref))}")

    # f32 compute path with ragged (non-tile-multiple) shapes -> exercises padding,
    # checked at tight tolerance against the reference.
    x2 = x[:10]
    w2 = weight[:200]
    l2 = jax.random.randint(kl2, (10,), 0, 200, dtype=jnp.int32)
    out2 = margin_cosine_product_from_weight(x2, w2, l2, block_b=16, block_c=128,
                                             compute_dtype=jnp.float32)
    out2 = jax.block_until_ready(out2)
    ref2 = _reference(x2, w2, l2)
    assert out2.shape == (10, 200)
    assert jnp.allclose(out2, ref2, rtol=1e-4, atol=1e-3), (
        f"f32 path max abs diff = {jnp.max(jnp.abs(out2 - ref2))}")

    print("KERNEL_OK")
</pallas_src>

<mosaic_0001>
module attributes {stable_mosaic.version = 11 : i64} {
  func.func @_mcp_kernel(%arg0: i32, %arg1: i32, %arg2: memref<4xi32, #tpu.memory_space<smem>>, %arg3: memref<16x1xi32, #tpu.memory_space<vmem>>, %arg4: memref<16x64xbf16, #tpu.memory_space<vmem>>, %arg5: memref<16x1xf32, #tpu.memory_space<vmem>>, %arg6: memref<64x128xbf16, #tpu.memory_space<vmem>>, %arg7: memref<1x128xf32, #tpu.memory_space<vmem>>, %arg8: memref<16x128xf32, #tpu.memory_space<vmem>>) attributes {dimension_semantics = [#tpu.dimension_semantics<parallel>, #tpu.dimension_semantics<arbitrary>], iteration_bounds = array<i64: 2, 2>, scalar_prefetch = 1 : i64, scratch_operands = 0 : i64, tpu.core_type = #tpu.core_type<tc>, window_params = [{transform_indices = @transform_0, window_bounds = array<i64: 16, 1>}, {transform_indices = @transform_1, window_bounds = array<i64: 16, 64>}, {transform_indices = @transform_2, window_bounds = array<i64: 16, 1>}, {transform_indices = @transform_3, window_bounds = array<i64: 64, 128>}, {transform_indices = @transform_4, window_bounds = array<i64: 1, 128>}, {transform_indices = @transform_5, window_bounds = array<i64: 16, 128>}]} {
    %c0 = arith.constant 0 : index
    %c0_0 = arith.constant 0 : index
    %0 = vector.load %arg4[%c0, %c0_0] : memref<16x64xbf16, #tpu.memory_space<vmem>>, vector<16x64xbf16>
    %c0_1 = arith.constant 0 : index
    %c0_2 = arith.constant 0 : index
    %1 = vector.load %arg6[%c0_1, %c0_2] : memref<64x128xbf16, #tpu.memory_space<vmem>>, vector<64x128xbf16>
    %cst = arith.constant dense<0.000000e+00> : vector<16x128xf32>
    %2 = tpu.matmul %0, %1, %cst {dimension_numbers = #tpu.dot_dimension_numbers<[1], [0], [0], [1], [0, 0, 1, 1], [], []>} : vector<16x64xbf16>, vector<64x128xbf16>, vector<16x128xf32> -> vector<16x128xf32>
    %c0_3 = arith.constant 0 : index
    %c0_4 = arith.constant 0 : index
    %3 = vector.load %arg5[%c0_3, %c0_4] : memref<16x1xf32, #tpu.memory_space<vmem>>, vector<16x1xf32>
    %4 = vector.broadcast %3 : vector<16x1xf32> to vector<16x128xf32>
    %5 = arith.mulf %2, %4 : vector<16x128xf32>
    %c0_5 = arith.constant 0 : index
    %c0_6 = arith.constant 0 : index
    %6 = vector.load %arg7[%c0_5, %c0_6] : memref<1x128xf32, #tpu.memory_space<vmem>>, vector<1x128xf32>
    %7 = vector.broadcast %6 : vector<1x128xf32> to vector<16x128xf32>
    %8 = arith.mulf %5, %7 : vector<16x128xf32>
    %c2_i32 = arith.constant 2 : i32
    %9 = arith.muli %arg0, %c2_i32 : i32
    %10 = arith.addi %9, %arg1 : i32
    %11 = arith.index_cast %10 : i32 to index
    %12 = memref.load %arg2[%11] : memref<4xi32, #tpu.memory_space<smem>>
    %c0_i32 = arith.constant 0 : i32
    %13 = arith.cmpi eq, %12, %c0_i32 : i32
    %14 = arith.extui %13 : i1 to i32
    %c0_i32_7 = arith.constant 0 : i32
    %15 = arith.cmpi ne, %14, %c0_i32_7 : i32
    scf.if %15 {
      %c0_10 = arith.constant 0 : index
      %c0_11 = arith.constant 0 : index
      %19 = vector.load %arg8[%c0_10, %c0_11] : memref<16x128xf32, #tpu.memory_space<vmem>>, vector<16x128xf32>
      tpu.vector_store %arg8[%c0_10, %c0_11], %8 {strides = array<i32>} : memref<16x128xf32, #tpu.memory_space<vmem>>, vector<16x128xf32>,
    } else {
    }
    %c0_i32_8 = arith.constant 0 : i32
    %16 = arith.cmpi ne, %12, %c0_i32_8 : i32
    %17 = arith.extui %16 : i1 to i32
    %c0_i32_9 = arith.constant 0 : i32
    %18 = arith.cmpi ne, %17, %c0_i32_9 : i32
    scf.if %18 {
      %c128_i32 = arith.constant 128 : i32
      %19 = arith.muli %arg0, %c128_i32 : i32
      %20 = tpu.iota {dimensions = array<i32: 1>} : vector<1x128xi32>
      %21 = vector.broadcast %19 : i32 to vector<1x128xi32>
      %22 = arith.addi %20, %21 : vector<1x128xi32>
      %c0_10 = arith.constant 0 : index
      %c0_11 = arith.constant 0 : index
      %23 = vector.load %arg3[%c0_10, %c0_11] : memref<16x1xi32, #tpu.memory_space<vmem>>, vector<16x1xi32>
      %24 = vector.broadcast %22 : vector<1x128xi32> to vector<16x128xi32>
      %25 = vector.broadcast %23 : vector<16x1xi32> to vector<16x128xi32>
      %26 = arith.cmpi eq, %24, %25 : vector<16x128xi32>
      %cst_12 = arith.constant 0.000000e+00 : f32
      %27 = vector.broadcast %cst_12 : f32 to vector<16x128xf32>
      %28 = arith.select %26, %8, %27 : vector<16x128xi1>, vector<16x128xf32>
      %cst_13 = arith.constant dense<0.000000e+00> : vector<16xf32>
      %29 = vector.multi_reduction <add>, %28, %cst_13 [1] : vector<16x128xf32> to vector<16xf32>
      %30 = vector.shape_cast %29 : vector<16xf32> to vector<16x1xf32>
      %cst_14 = arith.constant 0.0333333351 : f32
      %31 = vector.broadcast %cst_14 : f32 to vector<16x1xf32>
      %32 = arith.mulf %30, %31 : vector<16x1xf32>
      %cst_15 = arith.constant 4.000000e+00 : f32
      %33 = vector.broadcast %cst_15 : f32 to vector<16x1xf32>
      %34 = arith.mulf %33, %32 : vector<16x1xf32>
      %35 = arith.mulf %34, %32 : vector<16x1xf32>
      %cst_16 = arith.constant 3.000000e+00 : f32
      %36 = vector.broadcast %cst_16 : f32 to vector<16x1xf32>
      %37 = arith.subf %35, %36 : vector<16x1xf32>
      %38 = arith.mulf %37, %32 : vector<16x1xf32>
      %cst_17 = arith.constant 5.000000e-01 : f32
      %39 = vector.broadcast %cst_17 : f32 to vector<16x1xf32>
      %40 = arith.cmpf ole, %32, %39 : vector<16x1xf32>
      %cst_18 = arith.constant -5.000000e-01 : f32
      %41 = vector.broadcast %cst_18 : f32 to vector<16x1xf32>
      %42 = arith.cmpf ole, %32, %41 : vector<16x1xf32>
      %cst_19 = arith.constant -1.000000e+00 : f32
      %43 = vector.broadcast %cst_19 : f32 to vector<16x1xf32>
      %44 = arith.cmpf ole, %32, %43 : vector<16x1xf32>
      %45 = arith.extui %40 : vector<16x1xi1> to vector<16x1xi32>
      %46 = arith.sitofp %45 : vector<16x1xi32> to vector<16x1xf32>
      %47 = arith.extui %42 : vector<16x1xi1> to vector<16x1xi32>
      %48 = arith.sitofp %47 : vector<16x1xi32> to vector<16x1xf32>
      %49 = arith.addf %46, %48 : vector<16x1xf32>
      %50 = arith.extui %44 : vector<16x1xi1> to vector<16x1xi32>
      %51 = arith.sitofp %50 : vector<16x1xi32> to vector<16x1xf32>
      %52 = arith.addf %49, %51 : vector<16x1xf32>
      %53 = arith.xori %40, %42 : vector<16x1xi1>
      %54 = arith.xori %53, %44 : vector<16x1xi1>
      %cst_20 = arith.constant -1.000000e+00 : f32
      %cst_21 = arith.constant 1.000000e+00 : f32
      %55 = vector.broadcast %cst_20 : f32 to vector<16x1xf32>
      %56 = vector.broadcast %cst_21 : f32 to vector<16x1xf32>
      %57 = arith.select %54, %55, %56 : vector<16x1xi1>, vector<16x1xf32>
      %58 = arith.mulf %57, %38 : vector<16x1xf32>
      %cst_22 = arith.constant 2.000000e+00 : f32
      %59 = vector.broadcast %cst_22 : f32 to vector<16x1xf32>
      %60 = arith.mulf %59, %52 : vector<16x1xf32>
      %61 = arith.subf %58, %60 : vector<16x1xf32>
      %cst_23 = arith.constant 3.000000e+01 : f32
      %62 = vector.broadcast %cst_23 : f32 to vector<16x1xf32>
      %63 = arith.mulf %62, %61 : vector<16x1xf32>
      %64 = vector.shape_cast %63 : vector<16x1xf32> to vector<16x1xf32>
      %65 = vector.broadcast %64 : vector<16x1xf32> to vector<16x128xf32>
      %66 = arith.select %26, %65, %8 : vector<16x128xi1>, vector<16x128xf32>
      %c0_24 = arith.constant 0 : index
      %c0_25 = arith.constant 0 : index
      %67 = vector.load %arg8[%c0_24, %c0_25] : memref<16x128xf32, #tpu.memory_space<vmem>>, vector<16x128xf32>
      tpu.vector_store %arg8[%c0_24, %c0_25], %66 {strides = array<i32>} : memref<16x128xf32, #tpu.memory_space<vmem>>, vector<16x128xf32>,
    } else {
    }
    return
  }
  func.func @transform_0(%arg0: i32, %arg1: i32, %arg2: memref<4xi32, #tpu.memory_space<smem>>) -> (i32, i32) {
    %c0_i32 = arith.constant 0 : i32
    %c0_i32_0 = arith.constant 0 : i32
    return %arg1, %c0_i32 : i32, i32
  }
  func.func @transform_1(%arg0: i32, %arg1: i32, %arg2: memref<4xi32, #tpu.memory_space<smem>>) -> (i32, i32) {
    %c0_i32 = arith.constant 0 : i32
    %c0_i32_0 = arith.constant 0 : i32
    return %arg1, %c0_i32 : i32, i32
  }
  func.func @transform_2(%arg0: i32, %arg1: i32, %arg2: memref<4xi32, #tpu.memory_space<smem>>) -> (i32, i32) {
    %c0_i32 = arith.constant 0 : i32
    %c0_i32_0 = arith.constant 0 : i32
    return %arg1, %c0_i32 : i32, i32
  }
  func.func @transform_3(%arg0: i32, %arg1: i32, %arg2: memref<4xi32, #tpu.memory_space<smem>>) -> (i32, i32) {
    %c0_i32 = arith.constant 0 : i32
    %c0_i32_0 = arith.constant 0 : i32
    return %c0_i32, %arg0 : i32, i32
  }
  func.func @transform_4(%arg0: i32, %arg1: i32, %arg2: memref<4xi32, #tpu.memory_space<smem>>) -> (i32, i32) {
    %c0_i32 = arith.constant 0 : i32
    %c0_i32_0 = arith.constant 0 : i32
    return %c0_i32, %arg0 : i32, i32
  }
  func.func @transform_5(%arg0: i32, %arg1: i32, %arg2: memref<4xi32, #tpu.memory_space<smem>>) -> (i32, i32) {
    %c0_i32 = arith.constant 0 : i32
    return %arg1, %arg0 : i32, i32
  }
}

</mosaic_0001>

<llo_original>
// kernel: tpu_custom_call.1
$region0: #{tpu_custom_call.1}
  #allocation0 [shape = 'u32[]', space=smem, size = 0x4, offset = 0x4, fixed_abs, tag = 'smem constant byte address 0x4 - core index']
  #allocation1 [shape = 'u32[144,128]{1,0:T(1,128)}', space=vmem, size = 0x12000, scoped, tag = 'internal scratch']
  #allocation2 [shape = 's32[1]{0}', space=sflag, size = 0x4, scoped, tag = 'scoped memory for tpu_custom_call.1']
  #allocation3 [shape = 'u8[512]{0}', space=smem, size = 0x200, scoped, tag = 'prefetched SMEM operand 0']
  %s0 = inlined_call_operand.vmem [shape: s32[4], index: 0, kind: input, shape index: {}]
  %s1 = inlined_call_operand.vmem [shape: s32[32,1], index: 1, kind: input, shape index: {}]
  %s2 = inlined_call_operand.vmem [shape: bf16[32,64], index: 2, kind: input, shape index: {}]
  %s3 = inlined_call_operand.vmem [shape: f32[32,1], index: 3, kind: input, shape index: {}]
  %s4 = inlined_call_operand.vmem [shape: bf16[64,256], index: 4, kind: input, shape index: {}]
  %s5 = inlined_call_operand.vmem [shape: f32[1,256], index: 5, kind: input, shape index: {}]
  %s6 = inlined_call_operand.hbm [shape: f32[32,256], index: 6, kind: output, shape index: {}]
  %s7 = sld [smem:[#allocation0]]
  $region102: #{tpu_custom_call.1} parent=0
    _
  %s9 = ssub.s32 1, %s7
  %s10 = scalar_select 0, %s9, %s7
  %s11 = sshll.u32 %s0, 4
  %s12 = int_to_ptr.vmem [resolvable:$true] %s11
  %14 = dma.vmem_to_smem %s12, 16, [#allocation3], [#allocation2]
  %15 = dma.done [#allocation2], 16
  %16 = sfence
  $region1: #{tpu_custom_call.1} parent=0
    #allocation4 [shape = 'u8[32768]{0}', space=vmem, size = 0x8000, scoped, tag = 'input window, operand 4']
    #allocation5 [shape = 'u8[16384]{0}', space=vmem, size = 0x4000, scoped, tag = 'output window, operand 0']
    #allocation6 [shape = 's32[2]{0}', space=sflag, size = 0x8, scoped, tag = 'scoped memory for tpu_custom_call.1']
    %17 = vsyncpa [#allocation6], 0
    %s18 = scalar_lea.sflag [#allocation6], 1
    %19 = vsyncpa %s18, 0
    loop: start=0, step=1, limit=6
    $region2: #{tpu_custom_call.1} parent=1 // loop_pre_header
      _
    $region3: #{tpu_custom_call.1} parent=1 // loop_header
      %s21 = sphi 0, %s25
      %p22 = scmp.ge.s32.totalorder %s21, 6
      %s28 = sphi 0, %s40
      %s29 = sphi 0, %s36
      %s30 = sphi 0, %s28
      %s31 = sphi 0, %s29
      %s32 = sphi 0, %s30
      %s33 = sphi 0, %s31
      %s43 = sphi 0, %s45
      %s46 = sphi 0, %s43
      %s47 = sphi 0, %s46
      %s63 = sphi 0, %s47
      %s69 = sphi 0, %s71
      %s72 = sphi 0, %s69
      %s73 = sphi 0, %s72
      %s89 = sphi 0, %s73
      %s95 = sphi 0, %s97
      %s98 = sphi 0, %s95
      %s99 = sphi 0, %s98
      %s115 = sphi 0, %s99
      %s121 = sphi 0, %s123
      %s124 = sphi 0, %s121
      %s125 = sphi 0, %s124
      %s141 = sphi 0, %s125
      %s147 = sphi 0, %s149
      %s150 = sphi 0, %s147
      %s151 = sphi 0, %s150
      %s167 = sphi 0, %s151
      %s175 = sphi 0, %s177
      %s178 = sphi 0, %s175
      %s179 = sphi 0, %s178
      %s195 = sphi 0, %s179
    $region4: #{tpu_custom_call.1} parent=1 // loop_header_branch
      %24 = sbr.rel (%p22) target = $region8
    $region5: #{tpu_custom_call.1} parent=1 // loop_body
      %s26 = ssub.s32 %s21, 1
      %s27 = ssub.s32 %s21, 2
      %s34 = sadd.s32 1, %s29
      %p35 = scmp.ge.s32.totalorder %s34, 2
      %s36 = scalar_select %p35, 0, %s34
      %s37 = sadd.s32 1, %s28
      %s38 = scalar_select %p35, %s37, %s28
      %p39 = scmp.ge.s32.totalorder %s38, 2
      %s40 = scalar_select %p39, 0, %s38
      %s41 = ssub.s32 %s29, %s36
      %p42 = scmp.eq.s32.totalorder %s41, 0
      %s44 = sadd.s32 %s43, 1
      %s45 = scalar_select %p42, %s43, %s44
      %p48 = pneg %p42
      %p49 = scmp.eq.s32.totalorder %s21, 3
      %p50 = por %p48, %p49
      %p51 = scmp.ne.s32.totalorder %s43, %s46
      %p52 = scmp.eq.s32.totalorder %s21, 0
      %p53 = por %p51, %p52
      %p54 = scmp.ne.s32.totalorder %s43, %s46
      %p55 = scmp.eq.s32.totalorder %s26, 3
      %p56 = por %p54, %p55
      %p57 = scmp.ne.s32.totalorder %s46, %s47
      %p58 = scmp.eq.s32.totalorder %s26, 0
      %p59 = por %p57, %p58
      %p60 = scmp.ne.s32.totalorder %s46, %s47
      %p61 = scmp.eq.s32.totalorder %s27, 3
      %p62 = por %p60, %p61
      %p64 = scmp.ne.s32.totalorder %s47, %s63
      %p65 = scmp.eq.s32.totalorder %s27, 0
      %p66 = por %p64, %p65
      %s67 = ssub.s32 %s29, %s36
      %p68 = scmp.eq.s32.totalorder %s67, 0
      %s70 = sadd.s32 %s69, 1
      %s71 = scalar_select %p68, %s69, %s70
      %p74 = pneg %p68
      %p75 = scmp.eq.s32.totalorder %s21, 3
      %p76 = por %p74, %p75
      %p77 = scmp.ne.s32.totalorder %s69, %s72
      %p78 = scmp.eq.s32.totalorder %s21, 0
      %p79 = por %p77, %p78
      %p80 = scmp.ne.s32.totalorder %s69, %s72
      %p81 = scmp.eq.s32.totalorder %s26, 3
      %p82 = por %p80, %p81
      %p83 = scmp.ne.s32.totalorder %s72, %s73
      %p84 = scmp.eq.s32.totalorder %s26, 0
      %p85 = por %p83, %p84
      %p86 = scmp.ne.s32.totalorder %s72, %s73
      %p87 = scmp.eq.s32.totalorder %s27, 3
      %p88 = por %p86, %p87
      %p90 = scmp.ne.s32.totalorder %s73, %s89
      %p91 = scmp.eq.s32.totalorder %s27, 0
      %p92 = por %p90, %p91
      %s93 = ssub.s32 %s29, %s36
      %p94 = scmp.eq.s32.totalorder %s93, 0
      %s96 = sadd.s32 %s95, 1
      %s97 = scalar_select %p94, %s95, %s96
      %p100 = pneg %p94
      %p101 = scmp.eq.s32.totalorder %s21, 3
      %p102 = por %p100, %p101
      %p103 = scmp.ne.s32.totalorder %s95, %s98
      %p104 = scmp.eq.s32.totalorder %s21, 0
      %p105 = por %p103, %p104
      %p106 = scmp.ne.s32.totalorder %s95, %s98
      %p107 = scmp.eq.s32.totalorder %s26, 3
      %p108 = por %p106, %p107
      %p109 = scmp.ne.s32.totalorder %s98, %s99
      %p110 = scmp.eq.s32.totalorder %s26, 0
      %p111 = por %p109, %p110
      %p112 = scmp.ne.s32.totalorder %s98, %s99
      %p113 = scmp.eq.s32.totalorder %s27, 3
      %p114 = por %p112, %p113
      %p116 = scmp.ne.s32.totalorder %s99, %s115
      %p117 = scmp.eq.s32.totalorder %s27, 0
      %p118 = por %p116, %p117
      %s119 = ssub.s32 %s28, %s40
      %p120 = scmp.eq.s32.totalorder %s119, 0
      %s122 = sadd.s32 %s121, 1
      %s123 = scalar_select %p120, %s121, %s122
      %p126 = pneg %p120
      %p127 = scmp.eq.s32.totalorder %s21, 3
      %p128 = por %p126, %p127
      %p129 = scmp.ne.s32.totalorder %s121, %s124
      %p130 = scmp.eq.s32.totalorder %s21, 0
      %p131 = por %p129, %p130
      %p132 = scmp.ne.s32.totalorder %s121, %s124
      %p133 = scmp.eq.s32.totalorder %s26, 3
      %p134 = por %p132, %p133
      %p135 = scmp.ne.s32.totalorder %s124, %s125
      %p136 = scmp.eq.s32.totalorder %s26, 0
      %p137 = por %p135, %p136
      %p138 = scmp.ne.s32.totalorder %s124, %s125
      %p139 = scmp.eq.s32.totalorder %s27, 3
      %p140 = por %p138, %p139
      %p142 = scmp.ne.s32.totalorder %s125, %s141
      %p143 = scmp.eq.s32.totalorder %s27, 0
      %p144 = por %p142, %p143
      %s145 = ssub.s32 %s28, %s40
      %p146 = scmp.eq.s32.totalorder %s145, 0
      %s148 = sadd.s32 %s147, 1
      %s149 = scalar_select %p146, %s147, %s148
      %p152 = pneg %p146
      %p153 = scmp.eq.s32.totalorder %s21, 3
      %p154 = por %p152, %p153
      %p155 = scmp.ne.s32.totalorder %s147, %s150
      %p156 = scmp.eq.s32.totalorder %s21, 0
      %p157 = por %p155, %p156
      %p158 = scmp.ne.s32.totalorder %s147, %s150
      %p159 = scmp.eq.s32.totalorder %s26, 3
      %p160 = por %p158, %p159
      %p161 = scmp.ne.s32.totalorder %s150, %s151
      %p162 = scmp.eq.s32.totalorder %s26, 0
      %p163 = por %p161, %p162
      %p164 = scmp.ne.s32.totalorder %s150, %s151
      %p165 = scmp.eq.s32.totalorder %s27, 3
      %p166 = por %p164, %p165
      %p168 = scmp.ne.s32.totalorder %s151, %s167
      %p169 = scmp.eq.s32.totalorder %s27, 0
      %p170 = por %p168, %p169
      %s171 = ssub.s32 %s29, %s36
      %s172 = ssub.s32 %s28, %s40
      %s173 = sor.u32 %s171, %s172
      %p174 = scmp.eq.s32.totalorder %s173, 0
      %s176 = sadd.s32 %s175, 1
      %s177 = scalar_select %p174, %s175, %s176
      %p180 = pneg %p174
      %p181 = scmp.eq.s32.totalorder %s21, 3
      %p182 = por %p180, %p181
      %p183 = scmp.ne.s32.totalorder %s175, %s178
      %p184 = scmp.eq.s32.totalorder %s21, 0
      %p185 = por %p183, %p184
      %p186 = scmp.ne.s32.totalorder %s175, %s178
      %p187 = scmp.eq.s32.totalorder %s26, 3
      %p188 = por %p186, %p187
      %p189 = scmp.ne.s32.totalorder %s178, %s179
      %p190 = scmp.eq.s32.totalorder %s26, 0
      %p191 = por %p189, %p190
      %p192 = scmp.ne.s32.totalorder %s178, %s179
      %p193 = scmp.eq.s32.totalorder %s27, 3
      %p194 = por %p192, %p193
      %p196 = scmp.ne.s32.totalorder %s179, %s195
      %p197 = scmp.eq.s32.totalorder %s27, 0
      %p198 = por %p196, %p197
      %p199 = scmp.le.s32.totalorder 1, %s21
      %p200 = scmp.lt.s32.totalorder %s21, 5
      %p201 = pnand %p199, %p200
      %p202 = pneg %p201
      // Predicated region
      $region9: #{tpu_custom_call.1} parent=5 // pred_check
        _
      $region10: #{tpu_custom_call.1} parent=5 // pred_check_branch
        %204 = sbr.rel (%p201) target = $region12
      $region11: #{tpu_custom_call.1} parent=5 // pred_region
        %s205 = ssub.s32 %s21, 1
      $region12: #{tpu_custom_call.1} parent=5 // pred_fallthru
        _
      %p206 = scmp.lt.s32.totalorder %s21, 4
      // Predicated region
      $region13: #{tpu_custom_call.1} parent=5 // pred_check
        %p207 = pneg %p206
      $region14: #{tpu_custom_call.1} parent=5 // pred_check_branch
        %209 = sbr.rel (%p207) target = $region16
      $region15: #{tpu_custom_call.1} parent=5 // pred_region
        // Predicated region
        $region17: #{tpu_custom_call.1} parent=15 // pred_check
          %p210 = pneg %p53
        $region18: #{tpu_custom_call.1} parent=15 // pred_check_branch
          %212 = sbr.rel (%p210) target = $region20
        $region19: #{tpu_custom_call.1} parent=15 // pred_region
          %s213 = smul.u32 2, %s29
          %p214 = scmp.lt.s32.totalorder %s213, 3
          %s215 = scalar_select %p214, %s213, 3
          %s216 = smul.addr %s215, 8
          %s217 = scalar_lea.vmem %s1, %s216
          %s218 = smul.u32 2, %s29
        $region20: #{tpu_custom_call.1} parent=15 // pred_fallthru
          _
        // Predicated region
        $region21: #{tpu_custom_call.1} parent=15 // pred_check
          %p219 = pneg %p79
        $region22: #{tpu_custom_call.1} parent=15 // pred_check_branch
          %221 = sbr.rel (%p219) target = $region24
        $region23: #{tpu_custom_call.1} parent=15 // pred_region
          %s222 = smul.u32 2, %s29
          %p223 = scmp.lt.s32.totalorder %s222, 3
          %s224 = scalar_select %p223, %s222, 3
          %s225 = smul.addr %s224, 4
          %s226 = scalar_lea.vmem %s2, %s225
          %s227 = smul.u32 2, %s29
        $region24: #{tpu_custom_call.1} parent=15 // pred_fallthru
          _
        // Predicated region
        $region25: #{tpu_custom_call.1} parent=15 // pred_check
          %p228 = pneg %p105
        $region26: #{tpu_custom_call.1} parent=15 // pred_check_branch
          %230 = sbr.rel (%p228) target = $region28
        $region27: #{tpu_custom_call.1} parent=15 // pred_region
          %s231 = smul.u32 2, %s29
          %p232 = scmp.lt.s32.totalorder %s231, 3
          %s233 = scalar_select %p232, %s231, 3
          %s234 = smul.addr %s233, 8
          %s235 = scalar_lea.vmem %s3, %s234
          %s236 = smul.u32 2, %s29
        $region28: #{tpu_custom_call.1} parent=15 // pred_fallthru
          _
        // Predicated region
        $region29: #{tpu_custom_call.1} parent=15 // pred_check
          %p237 = pneg %p131
        $region30: #{tpu_custom_call.1} parent=15 // pred_check_branch
          %239 = sbr.rel (%p237) target = $region32
        $region31: #{tpu_custom_call.1} parent=15 // pred_region
          %s240 = sand.u32 %s121, 1
          %s241 = sand.u32 %s121, 1
          %s242 = smul.addr %s241, 32
          %s243 = scalar_lea.vmem [#allocation4], %s242
          %s244 = smul.addr %s28, 4
          %s245 = scalar_lea.vmem %s4, %s244
          // Predicated region
          $region33: #{tpu_custom_call.1} parent=31 // pred_check
            _
          $region34: #{tpu_custom_call.1} parent=31 // pred_check_branch
            %247 = sbr.rel (0) target = $region36
          $region35: #{tpu_custom_call.1} parent=31 // pred_region
            // Predicated region
            $region37: #{tpu_custom_call.1} parent=35 // pred_check
              _
            $region38: #{tpu_custom_call.1} parent=35 // pred_check_branch
              %249 = sbr.rel target = $region40
            $region39: #{tpu_custom_call.1} parent=35 // pred_region
              // Predicated region
              $region52: #{tpu_custom_call.1} parent=39 // pred_check
                _
              $region53: #{tpu_custom_call.1} parent=39 // pred_check_branch
                %278 = sbr.rel (0) target = $region55
              $region54: #{tpu_custom_call.1} parent=39 // pred_region
                loop: start=0, step=1, limit=1
                $region56: #{tpu_custom_call.1} parent=54 // loop_pre_header
                  _
                $region57: #{tpu_custom_call.1} parent=54 // loop_header
                  %s280 = sphi 0, %s284
                  %p281 = scmp.ge.s32.totalorder %s280, 1
                  %s285 = sphi %s245, %s245
                  %s286 = sphi %s243, %s243
                $region58: #{tpu_custom_call.1} parent=54 // loop_header_branch
                  %283 = sbr.rel (%p281) target = $region62
                $region59: #{tpu_custom_call.1} parent=54 // loop_body
                  _
                $region60: #{tpu_custom_call.1} parent=54 // loop_footer
                  %s284 = sadd.s32 1, %s280
                $region61: #{tpu_custom_call.1} parent=54 // loop_footer_branch
                  %279 = sbr.rel target = $region57
                $region62: #{tpu_custom_call.1} parent=54 // loop_exit
                  _
                loop: start=0, step=1, limit=1
                $region63: #{tpu_custom_call.1} parent=54 // loop_pre_header
                  _
                $region64: #{tpu_custom_call.1} parent=54 // loop_header
                  %s289 = sphi 0, %s293
                  %p290 = scmp.ge.s32.totalorder %s289, 1
                  %s294 = sphi %s245, %s245
                  %s295 = sphi %s243, %s243
                $region65: #{tpu_custom_call.1} parent=54 // loop_header_branch
                  %292 = sbr.rel (%p290) target = $region69
                $region66: #{tpu_custom_call.1} parent=54 // loop_body
                  %v296 = vld [vmem:[%s294] sm:$0xf]
                  %297 = vst [vmem:[%s295] sm:$0xf] %v296
                  %v298 = vld [vmem:[%s294 + $0x8] sm:$0xf]
                  %299 = vst [vmem:[%s295 + $0x4] sm:$0xf] %v298
                  %v300 = vld [vmem:[%s294 + $0x10] sm:$0xf]
                  %301 = vst [vmem:[%s295 + $0x8] sm:$0xf] %v300
                  %v302 = vld [vmem:[%s294 + $0x18] sm:$0xf]
                  %303 = vst [vmem:[%s295 + $0xc] sm:$0xf] %v302
                  %v304 = vld [vmem:[%s294 + $0x20] sm:$0xf]
                  %305 = vst [vmem:[%s295 + $0x10] sm:$0xf] %v304
                  %v306 = vld [vmem:[%s294 + $0x28] sm:$0xf]
                  %307 = vst [vmem:[%s295 + $0x14] sm:$0xf] %v306
                  %v308 = vld [vmem:[%s294 + $0x30] sm:$0xf]
                  %309 = vst [vmem:[%s295 + $0x18] sm:$0xf] %v308
                  %v310 = vld [vmem:[%s294 + $0x38] sm:$0xf]
                  %311 = vst [vmem:[%s295 + $0x1c] sm:$0xf] %v310
                $region67: #{tpu_custom_call.1} parent=54 // loop_footer
                  %s293 = sadd.s32 1, %s289
                $region68: #{tpu_custom_call.1} parent=54 // loop_footer_branch
                  %288 = sbr.rel target = $region64
                $region69: #{tpu_custom_call.1} parent=54 // loop_exit
                  _
              $region55: #{tpu_custom_call.1} parent=39 // pred_fallthru
                _
            $region40: #{tpu_custom_call.1} parent=35 // pred_fallthru
              _
            // Predicated region
            $region41: #{tpu_custom_call.1} parent=35 // pred_check
              _
            $region42: #{tpu_custom_call.1} parent=35 // pred_check_branch
              %251 = sbr.rel (0) target = $region44
            $region43: #{tpu_custom_call.1} parent=35 // pred_region
              loop: start=0, step=1, limit=1
              $region45: #{tpu_custom_call.1} parent=43 // loop_pre_header
                _
              $region46: #{tpu_custom_call.1} parent=43 // loop_header
                %s254 = sphi 0, %s258
                %p255 = scmp.ge.s32.totalorder %s254, 1
                %s259 = sphi %s245, %s245
                %s260 = sphi %s243, %s243
              $region47: #{tpu_custom_call.1} parent=43 // loop_header_branch
                %257 = sbr.rel (%p255) target = $region51
              $region48: #{tpu_custom_call.1} parent=43 // loop_body
                %v261 = vld [vmem:[%s259] sm:$0xf]
                %262 = vst [vmem:[%s260] sm:$0xf] %v261
                %v263 = vld [vmem:[%s259 + $0x8] sm:$0xf]
                %264 = vst [vmem:[%s260 + $0x4] sm:$0xf] %v263
                %v265 = vld [vmem:[%s259 + $0x10] sm:$0xf]
                %266 = vst [vmem:[%s260 + $0x8] sm:$0xf] %v265
                %v267 = vld [vmem:[%s259 + $0x18] sm:$0xf]
                %268 = vst [vmem:[%s260 + $0xc] sm:$0xf] %v267
                %v269 = vld [vmem:[%s259 + $0x20] sm:$0xf]
                %270 = vst [vmem:[%s260 + $0x10] sm:$0xf] %v269
                %v271 = vld [vmem:[%s259 + $0x28] sm:$0xf]
                %272 = vst [vmem:[%s260 + $0x14] sm:$0xf] %v271
                %v273 = vld [vmem:[%s259 + $0x30] sm:$0xf]
                %274 = vst [vmem:[%s260 + $0x18] sm:$0xf] %v273
                %v275 = vld [vmem:[%s259 + $0x38] sm:$0xf]
                %276 = vst [vmem:[%s260 + $0x1c] sm:$0xf] %v275
              $region49: #{tpu_custom_call.1} parent=43 // loop_footer
                %s258 = sadd.s32 1, %s254
              $region50: #{tpu_custom_call.1} parent=43 // loop_footer_branch
                %253 = sbr.rel target = $region46
              $region51: #{tpu_custom_call.1} parent=43 // loop_exit
                _
            $region44: #{tpu_custom_call.1} parent=35 // pred_fallthru
              _
          $region36: #{tpu_custom_call.1} parent=31 // pred_fallthru
            _
          %312 = vnop
        $region32: #{tpu_custom_call.1} parent=15 // pred_fallthru
          _
        // Predicated region
        $region70: #{tpu_custom_call.1} parent=15 // pred_check
          %p313 = pneg %p157
        $region71: #{tpu_custom_call.1} parent=15 // pred_check_branch
          %315 = sbr.rel (%p313) target = $region73
        $region72: #{tpu_custom_call.1} parent=15 // pred_region
          %p316 = scmp.lt.s32.totalorder %s28, 1
          %s317 = scalar_select %p316, %s28, 1
          %s318 = scalar_lea.vmem %s5, %s317
        $region73: #{tpu_custom_call.1} parent=15 // pred_fallthru
          _
      $region16: #{tpu_custom_call.1} parent=5 // pred_fallthru
        _
      %p319 = scmp.le.s32.totalorder 1, %s21
      %p320 = scmp.lt.s32.totalorder %s21, 5
      %p321 = pnand %p319, %p320
      %p322 = pneg %p321
      // Predicated region
      $region74: #{tpu_custom_call.1} parent=5 // pred_check
        _
      $region75: #{tpu_custom_call.1} parent=5 // pred_check_branch
        %324 = sbr.rel (%p321) target = $region77
      $region76: #{tpu_custom_call.1} parent=5 // pred_region
        %s325 = ssub.s32 %s21, 1
        %s326 = sand.u32 %s124, 1
        %s327 = sand.u32 %s124, 1
        %s328 = smul.addr %s327, 32
        %s329 = scalar_lea.vmem [#allocation4], %s328
        // Predicated region
        $region78: #{tpu_custom_call.1} parent=76 // pred_check
          %p330 = pneg %p137
        $region79: #{tpu_custom_call.1} parent=76 // pred_check_branch
          %332 = sbr.rel (%p330) target = $region81
        $region80: #{tpu_custom_call.1} parent=76 // pred_region
          _
        $region81: #{tpu_custom_call.1} parent=76 // pred_fallthru
          _
        %s333 = smul.u32 2, %s31
        %p334 = scmp.lt.s32.totalorder %s333, 3
        %s335 = scalar_select %p334, %s333, 3
        %s336 = smul.addr %s335, 8
        %s337 = scalar_lea.vmem %s1, %s336
        %p338 = pneg %p59
        %p339 = pneg %p56
        %s340 = smul.u32 2, %s31
        %p341 = scmp.lt.s32.totalorder %s340, 3
        %s342 = scalar_select %p341, %s340, 3
        %s343 = smul.addr %s342, 4
        %s344 = scalar_lea.vmem %s2, %s343
        %p345 = pneg %p85
        %p346 = pneg %p82
        %s347 = smul.u32 2, %s31
        %p348 = scmp.lt.s32.totalorder %s347, 3
        %s349 = scalar_select %p348, %s347, 3
        %s350 = smul.addr %s349, 8
        %s351 = scalar_lea.vmem %s3, %s350
        %p352 = pneg %p111
        %p353 = pneg %p108
        %s354 = sand.u32 %s124, 1
        %s355 = sand.u32 %s124, 1
        %s356 = smul.addr %s355, 32
        %s357 = scalar_lea.vmem [#allocation4], %s356
        %p358 = pneg %p137
        %p359 = pneg %p134
        %p360 = scmp.lt.s32.totalorder %s30, 1
        %s361 = scalar_select %p360, %s30, 1
        %s362 = scalar_lea.vmem %s5, %s361
        %p363 = pneg %p163
        %p364 = pneg %p160
        %p365 = pneg %p191
        %p366 = pneg %p188
        %s367 = sand.u32 %s178, 1
        %s368 = scalar_lea.sflag [#allocation6], %s367
        %s369 = sand.u32 %s178, 1
        %s370 = smul.addr %s369, 16
        %s371 = scalar_lea.vmem [#allocation5], %s370
        %s372 = smul.u32 2, %s31
        %p373 = scmp.lt.s32.totalorder %s372, 3
        %s374 = scalar_select %p373, %s372, 3
        %s375 = smul.addr %s374, 8
        %s376 = scalar_lea.vmem %s1, %s375
        %s377 = smul.u32 2, %s31
        %s378 = smul.u32 2, %s31
        %p379 = scmp.lt.s32.totalorder %s378, 3
        %s380 = scalar_select %p379, %s378, 3
        %s381 = smul.addr %s380, 4
        %s382 = scalar_lea.vmem %s2, %s381
        %s383 = smul.u32 2, %s31
        %s384 = smul.u32 2, %s31
        %p385 = scmp.lt.s32.totalorder %s384, 3
        %s386 = scalar_select %p385, %s384, 3
        %s387 = smul.addr %s386, 8
        %s388 = scalar_lea.vmem %s3, %s387
        %s389 = smul.u32 2, %s31
        %p390 = scmp.lt.s32.totalorder %s30, 1
        %s391 = scalar_select %p390, %s30, 1
        %s392 = scalar_lea.vmem %s5, %s391
        %s393 = smul.u32 2, %s31
        %v395 = vld [vmem:[%s382] sm:$0xf]
        %v396 = vld [vmem:[%s382 + $0x4] sm:$0xf]
        %v397 = vld [vmem:[%s329] sm:$0xf]
        %v398 = vld [vmem:[%s329 + $0x4] sm:$0xf]
        %v399 = vld [vmem:[%s329 + $0x8] sm:$0xf]
        %v400 = vld [vmem:[%s329 + $0xc] sm:$0xf]
        %v401 = vld [vmem:[%s329 + $0x10] sm:$0xf]
        %v402 = vld [vmem:[%s329 + $0x14] sm:$0xf]
        %v403 = vld [vmem:[%s329 + $0x18] sm:$0xf]
        %v404 = vld [vmem:[%s329 + $0x1c] sm:$0xf]
        %v407 = vunpack.c.l.b16 %v395
        %v408 = vunpack.c.l.b16 %v396
        %v409 = vpack.c.b16 %v408, %v407
        %v418 = vunpack.c.l.b16 %v397
        %v419 = vunpack.c.l.b16 %v398
        %v420 = vunpack.c.l.b16 %v399
        %v421 = vunpack.c.l.b16 %v400
        %v422 = vunpack.c.l.b16 %v401
        %v423 = vunpack.c.l.b16 %v402
        %v424 = vunpack.c.l.b16 %v403
        %v425 = vunpack.c.l.b16 %v404
        %v426 = vpack.c.b16 %v419, %v418
        %v427 = vpack.c.b16 %v421, %v420
        %v428 = vpack.c.b16 %v423, %v422
        %v429 = vpack.c.b16 %v425, %v424
        %vm434 = vcmask 523264
        %v436 = vsel %vm434, %v409, 0
        %438 = vmatprep.subr.bf16.mxu0 0
        %439 = vmatpush1.bf16.msra.mxu0 %v426
        %440 = vmatprep.subr.bf16.mxu0 0
        %441 = vmatpush1.bf16.msra.mxu0 %v427
        %442 = vmatprep.subr.bf16.mxu0 0
        %443 = vmatpush1.bf16.msra.mxu0 %v428
        %444 = vmatprep.subr.bf16.mxu0 0
        %445 = vmatpush1.bf16.msra.mxu0 %v429
        %446 = vmatprep.subr.bf16.mxu0 0
        %447 = vmatpush1.bf16.msra.mxu0 0
        %448 = vmatprep.subr.bf16.mxu0 0
        %449 = vmatpush1.bf16.msra.mxu0 0
        %450 = vmatprep.subr.bf16.mxu0 0
        %451 = vmatpush1.bf16.msra.mxu0 0
        %452 = vmatprep.subr.bf16.mxu0 0
        %453 = vmatpush1.bf16.msra.mxu0 0
        %454 = vmatprep.subr.bf16.mxu0 0
        %455 = vmatpush1.bf16.msra.mxu0 0
        %456 = vmatprep.subr.bf16.mxu0 0
        %457 = vmatpush1.bf16.msra.mxu0 0
        %458 = vmatprep.subr.bf16.mxu0 0
        %459 = vmatpush1.bf16.msra.mxu0 0
        %460 = vmatprep.subr.bf16.mxu0 0
        %461 = vmatpush1.bf16.msra.mxu0 0
        %462 = vmatprep.subr.bf16.mxu0 0
        %463 = vmatpush1.bf16.msra.mxu0 0
        %464 = vmatprep.subr.bf16.mxu0 0
        %465 = vmatpush1.bf16.msra.mxu0 0
        %466 = vmatprep.subr.bf16.mxu0 0
        %467 = vmatpush1.bf16.msra.mxu0 0
        %468 = vmatprep.subr.bf16.mxu0 0
        %469 = vmatpush1.bf16.msra.mxu0 0
        %470 = vmatprep.mubr.bf16.mxu0 0
        %471 = vmatmul.mubr.bf16.gmra.mrb[0].mxu0 %v436
        %v472 = vpop.f32.mrb[0].mxu0
        %v473 = vadd.f32 0.0, %v472
        %v474 = vpop.f32.mrb[0].mxu0
        %v475 = vpop.f32.mrb[0].mxu0
        %v476 = vadd.f32 0.0, %v475
        %v477 = vpop.f32.mrb[0].mxu0
        %478 = vdwg.mxu0
        %v479 = vld [vmem:[%s388] sm:$0xff]
        %v480 = vld [vmem:[%s388 + $0x8] sm:$0xff]
        %482 = vset.pattern.permute.xlu0 0
        %483 = vperm.xlu0 %482, %v479
        %v484 = vpop.permute.xlu0 %483
        %487 = vset.pattern.permute.xlu0 0
        %488 = vperm.xlu0 %487, %v480
        %v489 = vpop.permute.xlu0 %488
        %v491 = vmul.f32 %v473, %v484
        %v492 = vmul.f32 %v476, %v489
        %v493 = vld [vmem:[%s392] sm:$0x1]
        %v495 = vlaneseq
        %v496 = vshrl.u32 %v495, 7
        %v497 = vsub.s32 0, %v496
        %v498 = vrot.slane %v493, %v497
        %v500 = vmul.f32 %v491, %v498
        %v501 = vmul.f32 %v492, %v498
        %s502 = smul.u32 %s30, 2
        %s503 = sadd.s32 %s502, %s31
        %s504 = sld [smem:[#allocation3 + %s503]]
        %p505 = scmp.eq.s32.totalorder %s504, 0
        // Predicated region
        $region82: #{tpu_custom_call.1} parent=76 // pred_check
          %p506 = pneg %p505
        $region83: #{tpu_custom_call.1} parent=76 // pred_check_branch
          %508 = sbr.rel (%p506) target = $region85
        $region84: #{tpu_custom_call.1} parent=76 // pred_region
          %509 = vst [vmem:[%s371] sm:$0xff] %v500
          %510 = vst [vmem:[%s371 + $0x8] sm:$0xff] %v501
        $region85: #{tpu_custom_call.1} parent=76 // pred_fallthru
          _
        %p511 = scmp.ne.s32.totalorder %s504, 0
        // Predicated region
        $region86: #{tpu_custom_call.1} parent=76 // pred_check
          %p512 = pneg %p511
        $region87: #{tpu_custom_call.1} parent=76 // pred_check_branch
          %514 = sbr.rel (%p512) target = $region89
        $region88: #{tpu_custom_call.1} parent=76 // pred_region
          %s515 = smul.u32 %s30, 128
          %v516 = vlaneseq
          %v517 = vand.u32 %v516, 127
          %v518 = vstv %s515
          %v519 = vadd.s32 %v517, %v518
          %v520 = vld [vmem:[%s376] sm:$0xff]
          %v521 = vld [vmem:[%s376 + $0x8] sm:$0xff]
          %522 = vset.pattern.permute.xlu0 0
          %523 = vperm.xlu0 %522, %v520
          %v524 = vpop.permute.xlu0 %523
          %525 = vset.pattern.permute.xlu0 0
          %526 = vperm.xlu0 %525, %v521
          %v527 = vpop.permute.xlu0 %526
          %vm528 = vcmp.eq.s32.totalorder %v519, %v524
          %vm529 = vcmp.eq.s32.totalorder %v519, %v527
          %v530 = vsel %vm528, %v500, 0.0
          %v531 = vsel %vm529, %v501, 0.0
          %532 = vadd.xlane.f32.xlu0 %v530
          %v533 = vpop.xlane.xlu0 %532
          %534 = vadd.xlane.f32.xlu0 %v531
          %v535 = vpop.xlane.xlu0 %534
          %v536 = vmul.f32 %v533, 0.033333335
          %v537 = vmul.f32 %v535, 0.033333335
          %v538 = vmul.f32 %v536, 4.0
          %v539 = vmul.f32 %v537, 4.0
          %v540 = vmul.f32 %v538, %v536
          %v541 = vmul.f32 %v539, %v537
          %v542 = vsub.f32 %v540, 3.0
          %v543 = vsub.f32 %v541, 3.0
          %v544 = vmul.f32 %v542, %v536
          %v545 = vmul.f32 %v543, %v537
          %vm546 = vcmp.le.f32.partialorder %v536, 0.5
          %vm547 = vcmp.le.f32.partialorder %v537, 0.5
          %vm548 = vcmp.le.f32.partialorder %v536, -0.5
          %vm549 = vcmp.le.f32.partialorder %v537, -0.5
          %vm550 = vcmp.le.f32.partialorder %v536, -1.0
          %vm551 = vcmp.le.f32.partialorder %v537, -1.0
          %v552 = vsel %vm546, 1, 0
          %v553 = vsel %vm547, 1, 0
          %v554 = vcvt.s32.f32 %v552
          %v555 = vcvt.s32.f32 %v553
          %v556 = vsel %vm548, 1, 0
          %v557 = vsel %vm549, 1, 0
          %v558 = vcvt.s32.f32 %v556
          %v559 = vcvt.s32.f32 %v557
          %v560 = vadd.f32 %v554, %v558
          %v561 = vadd.f32 %v555, %v559
          %v562 = vsel %vm550, 1, 0
          %v563 = vsel %vm551, 1, 0
          %v564 = vcvt.s32.f32 %v562
          %v565 = vcvt.s32.f32 %v563
          %v566 = vadd.f32 %v560, %v564
          %v567 = vadd.f32 %v561, %v565
          %vm568 = vmxor %vm546, %vm548
          %vm569 = vmxor %vm547, %vm549
          %vm570 = vmxor %vm568, %vm550
          %vm571 = vmxor %vm569, %vm551
          %v572 = vsel %vm570, -1.0, 1.0
          %v573 = vsel %vm571, -1.0, 1.0
          %v574 = vmul.f32 %v572, %v544
          %v575 = vmul.f32 %v573, %v545
          %v576 = vmul.f32 %v566, 2.0
          %v577 = vmul.f32 %v567, 2.0
          %v578 = vsub.f32 %v574, %v576
          %v579 = vsub.f32 %v575, %v577
          %v580 = vmul.f32 %v578, 30.0
          %v581 = vmul.f32 %v579, 30.0
          %v582 = vsel %vm528, %v580, %v500
          %v583 = vsel %vm529, %v581, %v501
          %584 = vst [vmem:[%s371] sm:$0xff] %v582
          %585 = vst [vmem:[%s371 + $0x8] sm:$0xff] %v583
        $region89: #{tpu_custom_call.1} parent=76 // pred_fallthru
          _
        %s586 = sand.u32 %s178, 1
        %s587 = scalar_lea.sflag [#allocation6], %s586
        %s588 = sand.u32 %s178, 1
        %s589 = smul.addr %s588, 16
        %s590 = scalar_lea.vmem [#allocation5], %s589
        // Predicated region
        $region90: #{tpu_custom_call.1} parent=76 // pred_check
          %p591 = pneg %p188
        $region91: #{tpu_custom_call.1} parent=76 // pred_check_branch
          %593 = sbr.rel (%p591) target = $region93
        $region92: #{tpu_custom_call.1} parent=76 // pred_region
          %s594 = smul.u32 2, %s31
          %s596 = ssub.s32 256, 256
          %597 = vsyncadd %s587, %s596
          %s598 = smul.addr %s594, 2
          %s599 = sadd.s32 %s30, %s598
          %s600 = smul.addr %s599, 128
          %s601 = scalar_lea.hbm %s6, %s600
          %s602 = sshll.u32 %s590, 4
          %s603 = int_to_ptr.vmem [resolvable:$true] %s602
          %608 = dma.vmem_to_hbm [thread:$0]  %s603, 256, %s601, %s587, 128, 256, 8
        $region93: #{tpu_custom_call.1} parent=76 // pred_fallthru
          _
      $region77: #{tpu_custom_call.1} parent=5 // pred_fallthru
        _
      %p609 = scmp.le.s32.totalorder 2, %s21
      // Predicated region
      $region94: #{tpu_custom_call.1} parent=5 // pred_check
        %p610 = pneg %p609
      $region95: #{tpu_custom_call.1} parent=5 // pred_check_branch
        %612 = sbr.rel (%p610) target = $region97
      $region96: #{tpu_custom_call.1} parent=5 // pred_region
        %s613 = ssub.s32 %s21, 2
        // Predicated region
        $region98: #{tpu_custom_call.1} parent=96 // pred_check
          %p614 = pneg %p194
        $region99: #{tpu_custom_call.1} parent=96 // pred_check_branch
          %616 = sbr.rel (%p614) target = $region101
        $region100: #{tpu_custom_call.1} parent=96 // pred_region
          %s617 = sand.u32 %s179, 1
          %s618 = scalar_lea.sflag [#allocation6], %s617
          %s619 = sand.u32 %s179, 1
          %s620 = smul.addr %s619, 16
          %s621 = scalar_lea.vmem [#allocation5], %s620
          %622 = dma.done %s618, 256
        $region101: #{tpu_custom_call.1} parent=96 // pred_fallthru
          _
      $region97: #{tpu_custom_call.1} parent=5 // pred_fallthru
        _
    $region6: #{tpu_custom_call.1} parent=1 // loop_footer
      %s25 = sadd.s32 1, %s21
    $region7: #{tpu_custom_call.1} parent=1 // loop_footer_branch
      %20 = sbr.rel target = $region3
    $region8: #{tpu_custom_call.1} parent=1 // loop_exit
      _
    %623 = vsyncpa [#allocation6], 1
    %s624 = scalar_lea.sflag [#allocation6], 1
    %625 = vsyncpa %s624, 1

</llo_original>
